<compile_context>
chip_gen: v6e
topology: v6e:2x2x1
jax: 0.10.0
libtpu: 0.0.40
codegen_flags: <defaults>
</compile_context>

<pallas_src>
import functools

import jax
import jax.numpy as jnp
from jax.experimental import pallas as pl
from jax.experimental.pallas import tpu as pltpu

_PAIRWISE_EPS = 1e-6   # matches torch.nn.functional.pairwise_distance default eps
_OUT_LANES = 128       # lane-dense per-tile output row (avoids masked partial stores)


def _round_up(x, m):
    return ((x + m - 1) // m) * m


def _contrastive_loss_kernel(margin_ref, e1_ref, e2_ref, lbl_ref, out_ref, *, nrows):
    i = pl.program_id(0)
    t = e1_ref.shape[0]  # tile_rows (static)

    # Streamed tiles arrive in their native dtype; all math is done in f32.
    diff = e1_ref[...].astype(jnp.float32) - e2_ref[...].astype(jnp.float32) + _PAIRWISE_EPS
    sq = jnp.sum(diff * diff, axis=-1, keepdims=True)        # (t, 1): ||e1 - e2 + eps||^2 per row

    # Move the per-row scalars to a lane-dense (1, t) layout so the sqrt/hinge/label tail and
    # the final reduction run on dense vregs instead of 1-lane-wide columns.
    sq = sq.reshape(1, t)
    dist = jnp.sqrt(sq)

    margin = margin_ref[0]                                     # single SMEM scalar read
    hinge = jnp.maximum(margin - dist, 0.0)
    lbl = lbl_ref[...].reshape(1, t)                           # already lane-dense from the wrapper

    # Positive term uses the squared distance directly (no sqrt -> square round trip).
    row_loss = 0.5 * (lbl * sq + (1.0 - lbl) * (hinge * hinge))

    # Mask rows past the true batch size: the ragged last tile reads unspecified data for
    # out-of-range rows, and un-masked zero rows would wrongly contribute 0.5*margin^2.
    lane = jax.lax.broadcasted_iota(jnp.int32, (1, t), 1)
    valid = (i * t + lane) < nrows
    tile_sum = jnp.sum(jnp.where(valid, row_loss, 0.0), axis=1, keepdims=True)   # (1, 1)

    # Lane-dense store of the per-tile partial sum (same value broadcast across 128 lanes).
    out_ref[...] = jnp.broadcast_to(tile_sum.reshape(1, 1, 1), out_ref.shape)


def _auto_tile_rows(B, D, itemsize, sub):
    if B <= sub:
        return B
    # ~2 MiB per embedding block -> 2 inputs x 2 pipeline buffers ~ 8 MiB of streamed operands:
    # large enough to sit near the HBM roofline, small enough for v7x's 64 MiB VMEM.
    budget = 2 * 1024 * 1024
    by_bytes = max(sub, (budget // max(1, D * itemsize)) // sub * sub)
    # Keep at least two tiles when the batch allows it so the "parallel" grid axis can be
    # split across v7x's two TensorCores (harmless no-op on single-TC v5e/v6e).
    by_split = max(sub, _round_up(-(-B // 2), sub))
    return min(by_bytes, by_split)


def contrastive_loss(embedding1, embedding2, label, margin=1.0, *, tile_rows=None):
    """embedding1, embedding2: (B, D) float arrays (any float dtype, streamed natively);
    label: (B,) of 0/1. Returns the scalar f32 mean contrastive loss."""
    B, D = embedding1.shape
    itemsize = jnp.dtype(embedding1.dtype).itemsize
    sub = {4: 8, 2: 16, 1: 32}.get(itemsize, 8)   # sublane multiple for the streamed dtype

    if tile_rows is None:
        tile_rows = _auto_tile_rows(B, D, itemsize, sub)
    else:
        tile_rows = max(1, min(int(tile_rows), B))
        if tile_rows < B:
            tile_rows = max(sub, (tile_rows // sub) * sub)

    num_tiles = -(-B // tile_rows)
    b_pad = num_tiles * tile_rows

    # Only the tiny label vector is cast/padded/reshaped (B floats); the embeddings are passed
    # through untouched — no extra HBM pass over the big operands.
    lbl = jnp.asarray(label, jnp.float32).reshape(B)
    if b_pad != B:
        lbl = jnp.pad(lbl, (0, b_pad - B))
    lbl = lbl.reshape(num_tiles, 1, tile_rows)

    margin_arr = jnp.asarray(margin, jnp.float32).reshape(1)

    # Advisory cost: pure HBM streaming (~3 flops/element + a per-row sqrt), native-dtype bytes.
    cost = pl.CostEstimate(
        flops=B * (3 * D + 10),
        transcendentals=B,
        bytes_accessed=2 * B * D * itemsize + b_pad * 4 + num_tiles * _OUT_LANES * 4 + 4,
    )

    partials = pl.pallas_call(
        functools.partial(_contrastive_loss_kernel, nrows=B),
        out_shape=jax.ShapeDtypeStruct((num_tiles, 1, _OUT_LANES), jnp.float32),
        grid=(num_tiles,),
        in_specs=[
            pl.BlockSpec(memory_space=pltpu.MemorySpace.SMEM),       # margin scalar
            pl.BlockSpec((tile_rows, D), lambda i: (i, 0)),          # embedding1 tile (native dtype)
            pl.BlockSpec((tile_rows, D), lambda i: (i, 0)),          # embedding2 tile (native dtype)
            pl.BlockSpec((1, 1, tile_rows), lambda i: (i, 0, 0)),    # lane-dense label row
        ],
        out_specs=pl.BlockSpec((1, 1, _OUT_LANES), lambda i: (i, 0, 0)),
        compiler_params=pltpu.CompilerParams(
            dimension_semantics=("parallel",),       # tiles independent -> megacore split on v7x
            vmem_limit_bytes=48 * 1024 * 1024,       # <= v7x's 64 MiB physical VMEM
        ),
        cost_estimate=cost,
    )(margin_arr, embedding1, embedding2, lbl)

    # Tiny final reduction over num_tiles partial sums + mean over the real batch.
    return jnp.sum(partials[:, 0, 0]) / jnp.float32(B)


def _reference(embedding1, embedding2, label, margin=1.0):
    diff = embedding1 - embedding2 + _PAIRWISE_EPS
    dist = jnp.sqrt(jnp.sum(diff * diff, axis=-1))
    losses = 0.5 * label * dist**2 + 0.5 * (1.0 - label) * jnp.maximum(margin - dist, 0.0) ** 2
    return jnp.mean(losses)


if __name__ == "__main__":
    key = jax.random.PRNGKey(0)
    k1, k2, k3 = jax.random.split(key, 3)

    # Case 1: small f32 batch, single tile.
    B, D = 8, 32
    e1 = jax.random.normal(k1, (B, D), dtype=jnp.float32)
    e2 = jax.random.normal(k2, (B, D), dtype=jnp.float32)
    lbl = jax.random.bernoulli(k3, p=0.5, shape=(B,)).astype(jnp.float32)
    loss = jax.block_until_ready(contrastive_loss(e1, e2, lbl, margin=1.0))
    ref = _reference(e1, e2, lbl, margin=1.0)
    assert jnp.allclose(loss, ref, atol=1e-5, rtol=1e-5), (loss, ref)

    # Case 2: ragged batch + forced small tile -> multi-tile grid with a masked last block,
    # and a different SMEM margin value.
    B2 = 20
    k4, k5, k6 = jax.random.split(jax.random.PRNGKey(1), 3)
    e1b = jax.random.normal(k4, (B2, D), dtype=jnp.float32)
    e2b = jax.random.normal(k5, (B2, D), dtype=jnp.float32)
    lblb = jax.random.bernoulli(k6, p=0.5, shape=(B2,)).astype(jnp.float32)
    loss2 = jax.block_until_ready(contrastive_loss(e1b, e2b, lblb, margin=2.0, tile_rows=8))
    ref2 = _reference(e1b, e2b, lblb, margin=2.0)
    assert jnp.allclose(loss2, ref2, atol=1e-5, rtol=1e-5), (loss2, ref2)

    # Case 3: native bf16 streaming (no wrapper-side cast of the embeddings), ragged last tile.
    B3 = 24
    k7, k8, k9 = jax.random.split(jax.random.PRNGKey(2), 3)
    e1c = jax.random.normal(k7, (B3, D), dtype=jnp.bfloat16)
    e2c = jax.random.normal(k8, (B3, D), dtype=jnp.bfloat16)
    lblc = jax.random.bernoulli(k9, p=0.5, shape=(B3,)).astype(jnp.float32)
    loss3 = jax.block_until_ready(contrastive_loss(e1c, e2c, lblc, margin=1.0))
    ref3 = _reference(e1c.astype(jnp.float32), e2c.astype(jnp.float32), lblc, margin=1.0)
    assert jnp.allclose(loss3, ref3, atol=1e-4, rtol=1e-4), (loss3, ref3)

    print("KERNEL_OK")
</pallas_src>

<mosaic_0001>
module attributes {stable_mosaic.version = 11 : i64} {
  func.func @_contrastive_loss_kernel(%arg0: i32, %arg1: memref<1xf32, #tpu.memory_space<smem>>, %arg2: memref<8x32xf32, #tpu.memory_space<vmem>>, %arg3: memref<8x32xf32, #tpu.memory_space<vmem>>, %arg4: memref<1x1x8xf32, #tpu.memory_space<vmem>>, %arg5: memref<1x1x128xf32, #tpu.memory_space<vmem>>) attributes {dimension_semantics = [#tpu.dimension_semantics<parallel>], iteration_bounds = array<i64: 1>, scalar_prefetch = 0 : i64, scratch_operands = 0 : i64, tpu.core_type = #tpu.core_type<tc>, window_params = [{transform_indices = @transform_0, window_bounds = array<i64: 1>}, {transform_indices = @transform_1, window_bounds = array<i64: 8, 32>}, {transform_indices = @transform_2, window_bounds = array<i64: 8, 32>}, {transform_indices = @transform_3, window_bounds = array<i64: 1, 1, 8>}, {transform_indices = @transform_4, window_bounds = array<i64: 1, 1, 128>}]} {
    %c0 = arith.constant 0 : index
    %c0_0 = arith.constant 0 : index
    %0 = vector.load %arg2[%c0, %c0_0] : memref<8x32xf32, #tpu.memory_space<vmem>>, vector<8x32xf32>
    %c0_1 = arith.constant 0 : index
    %c0_2 = arith.constant 0 : index
    %1 = vector.load %arg3[%c0_1, %c0_2] : memref<8x32xf32, #tpu.memory_space<vmem>>, vector<8x32xf32>
    %2 = arith.subf %0, %1 : vector<8x32xf32>
    %cst = arith.constant 9.99999997E-7 : f32
    %3 = vector.broadcast %cst : f32 to vector<8x32xf32>
    %4 = arith.addf %2, %3 : vector<8x32xf32>
    %5 = arith.mulf %4, %4 : vector<8x32xf32>
    %cst_3 = arith.constant dense<0.000000e+00> : vector<8xf32>
    %6 = vector.multi_reduction <add>, %5, %cst_3 [1] : vector<8x32xf32> to vector<8xf32>
    %7 = vector.shape_cast %6 : vector<8xf32> to vector<8x1xf32>
    %8 = vector.shape_cast %7 : vector<8x1xf32> to vector<1x8xf32>
    %9 = math.sqrt %8 : vector<1x8xf32>
    %c0_4 = arith.constant 0 : index
    %10 = memref.load %arg1[%c0_4] : memref<1xf32, #tpu.memory_space<smem>>
    %11 = vector.broadcast %10 : f32 to vector<1x8xf32>
    %12 = arith.subf %11, %9 : vector<1x8xf32>
    %cst_5 = arith.constant 0.000000e+00 : f32
    %13 = vector.broadcast %cst_5 : f32 to vector<1x8xf32>
    %14 = arith.maximumf %12, %13 : vector<1x8xf32>
    %c0_6 = arith.constant 0 : index
    %c0_7 = arith.constant 0 : index
    %c0_8 = arith.constant 0 : index
    %15 = vector.load %arg4[%c0_6, %c0_7, %c0_8] : memref<1x1x8xf32, #tpu.memory_space<vmem>>, vector<1x1x8xf32>
    %16 = vector.shape_cast %15 : vector<1x1x8xf32> to vector<1x8xf32>
    %17 = arith.mulf %16, %8 : vector<1x8xf32>
    %cst_9 = arith.constant 1.000000e+00 : f32
    %18 = vector.broadcast %cst_9 : f32 to vector<1x8xf32>
    %19 = arith.subf %18, %16 : vector<1x8xf32>
    %20 = arith.mulf %14, %14 : vector<1x8xf32>
    %21 = arith.mulf %19, %20 : vector<1x8xf32>
    %22 = arith.addf %17, %21 : vector<1x8xf32>
    %cst_10 = arith.constant 5.000000e-01 : f32
    %23 = vector.broadcast %cst_10 : f32 to vector<1x8xf32>
    %24 = arith.mulf %23, %22 : vector<1x8xf32>
    %25 = tpu.iota {dimensions = array<i32: 1>} : vector<1x8xi32>
    %c8_i32 = arith.constant 8 : i32
    %26 = arith.muli %arg0, %c8_i32 : i32
    %27 = vector.broadcast %26 : i32 to vector<1x8xi32>
    %28 = arith.addi %27, %25 : vector<1x8xi32>
    %c8_i32_11 = arith.constant 8 : i32
    %29 = vector.broadcast %c8_i32_11 : i32 to vector<1x8xi32>
    %30 = arith.cmpi slt, %28, %29 : vector<1x8xi32>
    %cst_12 = arith.constant 0.000000e+00 : f32
    %31 = vector.broadcast %cst_12 : f32 to vector<1x8xf32>
    %32 = arith.select %30, %24, %31 : vector<1x8xi1>, vector<1x8xf32>
    %cst_13 = arith.constant dense<0.000000e+00> : vector<1xf32>
    %33 = vector.multi_reduction <add>, %32, %cst_13 [1] : vector<1x8xf32> to vector<1xf32>
    %34 = vector.shape_cast %33 : vector<1xf32> to vector<1x1xf32>
    %35 = vector.shape_cast %34 : vector<1x1xf32> to vector<1x1x1xf32>
    %36 = vector.shape_cast %35 : vector<1x1x1xf32> to vector<1x1x1xf32>
    %37 = vector.broadcast %36 : vector<1x1x1xf32> to vector<1x1x128xf32>
    %c0_14 = arith.constant 0 : index
    %c0_15 = arith.constant 0 : index
    %c0_16 = arith.constant 0 : index
    %38 = vector.load %arg5[%c0_14, %c0_15, %c0_16] : memref<1x1x128xf32, #tpu.memory_space<vmem>>, vector<1x1x128xf32>
    tpu.vector_store %arg5[%c0_14, %c0_15, %c0_16], %37 {strides = array<i32>} : memref<1x1x128xf32, #tpu.memory_space<vmem>>, vector<1x1x128xf32>,
    return
  }
  func.func @transform_0(%arg0: i32) -> i32 {
    %c0_i32 = arith.constant 0 : i32
    %c0_i32_0 = arith.constant 0 : i32
    return %c0_i32 : i32
  }
  func.func @transform_1(%arg0: i32) -> (i32, i32) {
    %c0_i32 = arith.constant 0 : i32
    %c0_i32_0 = arith.constant 0 : i32
    return %arg0, %c0_i32 : i32, i32
  }
  func.func @transform_2(%arg0: i32) -> (i32, i32) {
    %c0_i32 = arith.constant 0 : i32
    %c0_i32_0 = arith.constant 0 : i32
    return %arg0, %c0_i32 : i32, i32
  }
  func.func @transform_3(%arg0: i32) -> (i32, i32, i32) {
    %c0_i32 = arith.constant 0 : i32
    %c0_i32_0 = arith.constant 0 : i32
    %c0_i32_1 = arith.constant 0 : i32
    return %arg0, %c0_i32, %c0_i32_0 : i32, i32, i32
  }
  func.func @transform_4(%arg0: i32) -> (i32, i32, i32) {
    %c0_i32 = arith.constant 0 : i32
    %c0_i32_0 = arith.constant 0 : i32
    %c0_i32_1 = arith.constant 0 : i32
    return %arg0, %c0_i32, %c0_i32_0 : i32, i32, i32
  }
}

</mosaic_0001>

<llo_original>
// kernel: tpu_custom_call.1
$region0: #{tpu_custom_call.1}
  #allocation0 [shape = 'u32[]', space=smem, size = 0x4, offset = 0x4, fixed_abs, tag = 'smem constant byte address 0x4 - core index']
  #allocation1 [shape = 'u32[144,128]{1,0:T(1,128)}', space=vmem, size = 0x12000, scoped, tag = 'internal scratch']
  #allocation2 [shape = 'f32[1]{0:T(128)S(6)}', space=smem, size = 0x200, scoped, tag = 'scoped memory for tpu_custom_call.1']
  %s0 = inlined_call_operand.<no memory space> [shape: f32[1], index: 0, kind: input, shape index: {}]
  %s1 = inlined_call_operand.hbm [shape: f32[8,32], index: 1, kind: input, shape index: {}]
  %s2 = inlined_call_operand.hbm [shape: f32[8,32], index: 2, kind: input, shape index: {}]
  %s3 = inlined_call_operand.vmem [shape: f32[1,1,8], index: 3, kind: input, shape index: {}]
  %s4 = inlined_call_operand.hbm [shape: f32[1,1,128], index: 4, kind: output, shape index: {}]
  %s5 = sld [smem:[#allocation0]]
  $region34: #{tpu_custom_call.1} parent=0
    _
  %s7 = ssub.s32 1, %s5
  %s8 = scalar_select 0, %s7, %s5
  %9 = sst [smem:[#allocation2]] %s0
  $region1: #{tpu_custom_call.1} parent=0
    #allocation3 [shape = 'u8[4096]{0}', space=vmem, size = 0x1000, scoped, tag = 'input window, operand 1, single buffered']
    #allocation4 [shape = 's32[1]{0}', space=sflag, size = 0x4, scoped, tag = 'scoped memory for tpu_custom_call.1']
    #allocation5 [shape = 's32[1]{0}', space=sflag, size = 0x4, scoped, tag = 'scoped memory for tpu_custom_call.1']
    #allocation6 [shape = 'u8[4096]{0}', space=vmem, size = 0x1000, scoped, tag = 'input window, operand 2, single buffered']
    #allocation7 [shape = 's32[1]{0}', space=sflag, size = 0x4, scoped, tag = 'scoped memory for tpu_custom_call.1']
    #allocation8 [shape = 'u8[512]{0}', space=vmem, size = 0x400, scoped, tag = 'output window, operand 0, single buffered']
    %10 = vsyncpa [#allocation4], 0
    %11 = vsyncpa [#allocation7], 0
    %12 = vsyncpa [#allocation5], 0
    // Predicated region
    $region2: #{tpu_custom_call.1} parent=1 // pred_check
      _
    $region3: #{tpu_custom_call.1} parent=1 // pred_check_branch
      %14 = sbr.rel (0) target = $region5
    $region4: #{tpu_custom_call.1} parent=1 // pred_region
      _
    $region5: #{tpu_custom_call.1} parent=1 // pred_fallthru
      _
    // Predicated region
    $region6: #{tpu_custom_call.1} parent=1 // pred_check
      _
    $region7: #{tpu_custom_call.1} parent=1 // pred_check_branch
      %16 = sbr.rel (0) target = $region9
    $region8: #{tpu_custom_call.1} parent=1 // pred_region
      %s18 = ssub.s32 128, 128
      %19 = vsyncadd [#allocation4], %s18
      %s21 = sshll.u32 [#allocation3], 4
      %s22 = int_to_ptr.vmem [resolvable:$true] %s21
      %24 = dma.hbm_to_vmem [thread:$0]  %s1, 128, %s22, [#allocation4]
    $region9: #{tpu_custom_call.1} parent=1 // pred_fallthru
      _
    // Predicated region
    $region10: #{tpu_custom_call.1} parent=1 // pred_check
      _
    $region11: #{tpu_custom_call.1} parent=1 // pred_check_branch
      %26 = sbr.rel (0) target = $region13
    $region12: #{tpu_custom_call.1} parent=1 // pred_region
      %s28 = ssub.s32 128, 128
      %29 = vsyncadd [#allocation7], %s28
      %s31 = sshll.u32 [#allocation6], 4
      %s32 = int_to_ptr.vmem [resolvable:$true] %s31
      %34 = dma.hbm_to_vmem [thread:$0]  %s2, 128, %s32, [#allocation7]
    $region13: #{tpu_custom_call.1} parent=1 // pred_fallthru
      _
    // Predicated region
    $region14: #{tpu_custom_call.1} parent=1 // pred_check
      _
    $region15: #{tpu_custom_call.1} parent=1 // pred_check_branch
      %36 = sbr.rel (0) target = $region17
    $region16: #{tpu_custom_call.1} parent=1 // pred_region
      _
    $region17: #{tpu_custom_call.1} parent=1 // pred_fallthru
      _
    // Predicated region
    $region18: #{tpu_custom_call.1} parent=1 // pred_check
      _
    $region19: #{tpu_custom_call.1} parent=1 // pred_check_branch
      %38 = sbr.rel (0) target = $region21
    $region20: #{tpu_custom_call.1} parent=1 // pred_region
      %39 = dma.done [#allocation4], 128
    $region21: #{tpu_custom_call.1} parent=1 // pred_fallthru
      _
    // Predicated region
    $region22: #{tpu_custom_call.1} parent=1 // pred_check
      _
    $region23: #{tpu_custom_call.1} parent=1 // pred_check_branch
      %41 = sbr.rel (0) target = $region25
    $region24: #{tpu_custom_call.1} parent=1 // pred_region
      %42 = dma.done [#allocation7], 128
    $region25: #{tpu_custom_call.1} parent=1 // pred_fallthru
      _
    %v43 = vld [vmem:[#allocation3] sm:$0xff]
    %v44 = vld [vmem:[#allocation6] sm:$0xff]
    %v45 = vsub.f32 %v43, %v44
    %v46 = vadd.f32 %v45, 1e-06
    %v47 = vmul.f32 %v46, %v46
    %vm48 = vcmask 261120
    %v49 = vsel %vm48, %v47, 0.0
    %50 = vadd.xlane.f32.xlu0 %v49
    %v51 = vpop.xlane.xlu0 %50
    %v52 = vrsqrt.pop %v51
    %v53 = vmul.f32 %v51, %v52
    %vm54 = vcmp.eq.f32.partialorder %v51, inf
    %v55 = vsel %vm54, %v51, %v53
    %vm56 = vcmp.eq.f32.partialorder %v51, 0.0
    %v57 = vand.u32 %v51, 2147483648
    %v58 = vsel %vm56, %v57, %v55
    %s59 = sld [smem:[#allocation2]]
    %v60 = vstv %s59
    %v61 = vsub.f32 %v60, %v58
    %v62 = vmax.f32 %v61, 0.0
    %v63 = vld [vmem:[%s3] sm:$0x1]
    %v65 = vlaneseq
    %v66 = vshrl.u32 %v65, 7
    %v67 = vsub.s32 0, %v66
    %v68 = vrot.slane %v51, %v67
    %v69 = vlaneseq
    %v70 = vshrl.u32 %v69, 7
    %v71 = vsub.s32 1, %v70
    %v72 = vrot.slane %v51, %v71
    %v73 = vlaneseq
    %v74 = vshrl.u32 %v73, 7
    %v75 = vsub.s32 2, %v74
    %v76 = vrot.slane %v51, %v75
    %v77 = vlaneseq
    %v78 = vshrl.u32 %v77, 7
    %v79 = vsub.s32 3, %v78
    %v80 = vrot.slane %v51, %v79
    %v81 = vlaneseq
    %v82 = vshrl.u32 %v81, 7
    %v83 = vsub.s32 4, %v82
    %v84 = vrot.slane %v51, %v83
    %v85 = vlaneseq
    %v86 = vshrl.u32 %v85, 7
    %v87 = vsub.s32 5, %v86
    %v88 = vrot.slane %v51, %v87
    %v89 = vlaneseq
    %v90 = vshrl.u32 %v89, 7
    %v91 = vsub.s32 6, %v90
    %v92 = vrot.slane %v51, %v91
    %v93 = vlaneseq
    %v94 = vshrl.u32 %v93, 7
    %v95 = vsub.s32 7, %v94
    %v96 = vrot.slane %v51, %v95
    %v97 = vcombine.low %v68, %v72
    %v98 = vcombine.low %v76, %v80
    %v99 = vcombine.low %v84, %v88
    %v100 = vcombine.low %v92, %v96
    %v102 = vunpack.c.l.s4 1966171168
    %v103 = vunpack.c.0.s8 %v102
    %v104 = vlaneseq
    %v105 = vshrl.u32 %v104, 7
    %v106 = vsub.s32 %v103, %v105
    %v107 = vrot.slane %v97, %v106
    %v109 = vunpack.c.l.s4 1966171168
    %v110 = vunpack.c.0.s8 %v109
    %v111 = vlaneseq
    %v112 = vshrl.u32 %v111, 7
    %v113 = vsub.s32 %v110, %v112
    %v114 = vrot.slane %v98, %v113
    %v116 = vunpack.c.l.s4 1966171168
    %v117 = vunpack.c.0.s8 %v116
    %v118 = vlaneseq
    %v119 = vshrl.u32 %v118, 7
    %v120 = vsub.s32 %v117, %v119
    %v121 = vrot.slane %v99, %v120
    %v123 = vunpack.c.l.s4 1966171168
    %v124 = vunpack.c.0.s8 %v123
    %v125 = vlaneseq
    %v126 = vshrl.u32 %v125, 7
    %v127 = vsub.s32 %v124, %v126
    %v128 = vrot.slane %v100, %v127
    %v129 = vcombine.low %v107, %v114
    %v130 = vcombine.low %v121, %v128
    %v132 = vunpack.c.l.s4 1966171168
    %v133 = vunpack.c.0.s8 %v132
    %v134 = vlaneseq
    %v135 = vshrl.u32 %v134, 7
    %v136 = vsub.s32 %v133, %v135
    %v137 = vrot.slane %v129, %v136
    %v139 = vunpack.c.l.s4 1966171168
    %v140 = vunpack.c.0.s8 %v139
    %v141 = vlaneseq
    %v142 = vshrl.u32 %v141, 7
    %v143 = vsub.s32 %v140, %v142
    %v144 = vrot.slane %v130, %v143
    %v145 = vcombine.low %v137, %v144
    %146 = vset.pattern.permute.xlu0 0
    %147 = vperm.xlu0 %146, %v145
    %v148 = vpop.permute.xlu0 %147
    %v149 = vlaneseq
    %v150 = vand.u32 %v149, 127
    %v151 = vlaneseq
    %v152 = vshrl.u32 %v151, 7
    %v153 = vsub.s32 %v150, %v152
    %v154 = vrot.slane %v148, %v153
    %v156 = vunpack.c.l.s4 1966171168
    %v157 = vunpack.c.0.s8 %v156
    %v158 = vlaneseq
    %v159 = vshrl.u32 %v158, 7
    %v160 = vsub.s32 %v157, %v159
    %v161 = vrot.slane %v154, %v160
    %v163 = vunpack.c.l.s4 1966171168
    %v164 = vunpack.c.0.s8 %v163
    %v165 = vlaneseq
    %v166 = vshrl.u32 %v165, 7
    %v167 = vsub.s32 %v164, %v166
    %v168 = vrot.slane %v161, %v167
    %v170 = vmul.f32 %v63, %v168
    %v171 = vsub.f32 1.0, %v63
    %v172 = vmul.f32 %v62, %v62
    %v174 = vlaneseq
    %v175 = vshrl.u32 %v174, 7
    %v176 = vsub.s32 0, %v175
    %v177 = vrot.slane %v172, %v176
    %v178 = vlaneseq
    %v179 = vshrl.u32 %v178, 7
    %v180 = vsub.s32 1, %v179
    %v181 = vrot.slane %v172, %v180
    %v182 = vlaneseq
    %v183 = vshrl.u32 %v182, 7
    %v184 = vsub.s32 2, %v183
    %v185 = vrot.slane %v172, %v184
    %v186 = vlaneseq
    %v187 = vshrl.u32 %v186, 7
    %v188 = vsub.s32 3, %v187
    %v189 = vrot.slane %v172, %v188
    %v190 = vlaneseq
    %v191 = vshrl.u32 %v190, 7
    %v192 = vsub.s32 4, %v191
    %v193 = vrot.slane %v172, %v192
    %v194 = vlaneseq
    %v195 = vshrl.u32 %v194, 7
    %v196 = vsub.s32 5, %v195
    %v197 = vrot.slane %v172, %v196
    %v198 = vlaneseq
    %v199 = vshrl.u32 %v198, 7
    %v200 = vsub.s32 6, %v199
    %v201 = vrot.slane %v172, %v200
    %v202 = vlaneseq
    %v203 = vshrl.u32 %v202, 7
    %v204 = vsub.s32 7, %v203
    %v205 = vrot.slane %v172, %v204
    %v206 = vcombine.low %v177, %v181
    %v207 = vcombine.low %v185, %v189
    %v208 = vcombine.low %v193, %v197
    %v209 = vcombine.low %v201, %v205
    %v211 = vunpack.c.l.s4 1966171168
    %v212 = vunpack.c.0.s8 %v211
    %v213 = vlaneseq
    %v214 = vshrl.u32 %v213, 7
    %v215 = vsub.s32 %v212, %v214
    %v216 = vrot.slane %v206, %v215
    %v218 = vunpack.c.l.s4 1966171168
    %v219 = vunpack.c.0.s8 %v218
    %v220 = vlaneseq
    %v221 = vshrl.u32 %v220, 7
    %v222 = vsub.s32 %v219, %v221
    %v223 = vrot.slane %v207, %v222
    %v225 = vunpack.c.l.s4 1966171168
    %v226 = vunpack.c.0.s8 %v225
    %v227 = vlaneseq
    %v228 = vshrl.u32 %v227, 7
    %v229 = vsub.s32 %v226, %v228
    %v230 = vrot.slane %v208, %v229
    %v232 = vunpack.c.l.s4 1966171168
    %v233 = vunpack.c.0.s8 %v232
    %v234 = vlaneseq
    %v235 = vshrl.u32 %v234, 7
    %v236 = vsub.s32 %v233, %v235
    %v237 = vrot.slane %v209, %v236
    %v238 = vcombine.low %v216, %v223
    %v239 = vcombine.low %v230, %v237
    %v241 = vunpack.c.l.s4 1966171168
    %v242 = vunpack.c.0.s8 %v241
    %v243 = vlaneseq
    %v244 = vshrl.u32 %v243, 7
    %v245 = vsub.s32 %v242, %v244
    %v246 = vrot.slane %v238, %v245
    %v248 = vunpack.c.l.s4 1966171168
    %v249 = vunpack.c.0.s8 %v248
    %v250 = vlaneseq
    %v251 = vshrl.u32 %v250, 7
    %v252 = vsub.s32 %v249, %v251
    %v253 = vrot.slane %v239, %v252
    %v254 = vcombine.low %v246, %v253
    %255 = vset.pattern.permute.xlu0 0
    %256 = vperm.xlu0 %255, %v254
    %v257 = vpop.permute.xlu0 %256
    %v258 = vlaneseq
    %v259 = vshrl.u32 %v258, 7
    %v260 = vsub.s32 %v150, %v259
    %v261 = vrot.slane %v257, %v260
    %v263 = vunpack.c.l.s4 1966171168
    %v264 = vunpack.c.0.s8 %v263
    %v265 = vlaneseq
    %v266 = vshrl.u32 %v265, 7
    %v267 = vsub.s32 %v264, %v266
    %v268 = vrot.slane %v261, %v267
    %v270 = vunpack.c.l.s4 1966171168
    %v271 = vunpack.c.0.s8 %v270
    %v272 = vlaneseq
    %v273 = vshrl.u32 %v272, 7
    %v274 = vsub.s32 %v271, %v273
    %v275 = vrot.slane %v268, %v274
    %v277 = vmul.f32 %v171, %v275
    %v278 = vadd.f32 %v170, %v277
    %v279 = vmul.f32 %v278, 0.5
    %s280 = smul.u32 0, 8
    %v281 = vstv %s280
    %v282 = vadd.s32 %v281, %v150
    %vm283 = vcmp.lt.s32.totalorder %v282, 8
    %v284 = vsel %vm283, %v279, 0.0
    %vm285 = vcmask 57344
    %v286 = vsel %vm285, %v284, 0.0
    %287 = vadd.xlane.f32.xlu0 %v286
    %v288 = vpop.xlane.xlu0 %287
    %289 = vst [vmem:[#allocation8] sm:$0x1] %v288
    // Predicated region
    $region26: #{tpu_custom_call.1} parent=1 // pred_check
      _
    $region27: #{tpu_custom_call.1} parent=1 // pred_check_branch
      %291 = sbr.rel (0) target = $region29
    $region28: #{tpu_custom_call.1} parent=1 // pred_region
      %s293 = ssub.s32 16, 16
      %294 = vsyncadd [#allocation5], %s293
      %s296 = sshll.u32 [#allocation8], 4
      %s297 = int_to_ptr.vmem [resolvable:$true] %s296
      %299 = dma.vmem_to_hbm [thread:$0]  %s297, 16, %s4, [#allocation5]
    $region29: #{tpu_custom_call.1} parent=1 // pred_fallthru
      _
    // Predicated region
    $region30: #{tpu_custom_call.1} parent=1 // pred_check
      _
    $region31: #{tpu_custom_call.1} parent=1 // pred_check_branch
      %301 = sbr.rel (0) target = $region33
    $region32: #{tpu_custom_call.1} parent=1 // pred_region
      %302 = dma.done [#allocation5], 16
    $region33: #{tpu_custom_call.1} parent=1 // pred_fallthru
      _
    %303 = vsyncpa [#allocation4], 1
    %304 = vsyncpa [#allocation7], 1
    %305 = vsyncpa [#allocation5], 1

</llo_original>
